<compile_context>
chip_gen: v6e
topology: v6e:2x2x1
jax: 0.10.0
libtpu: 0.0.40
codegen_flags: <defaults>
</compile_context>

<pallas_src>
import jax
import jax.numpy as jnp
from jax.experimental import pallas as pl
from jax.experimental.pallas import tpu as pltpu


HID1 = 64      # fco1 / fca1 output width
HID_CAT = 128  # fc2 input width (fan_in used for init)
HID2 = 64      # fc2 output width


def env_net_kernel(obs_ref, act_ref,
                   w1_ref, b1_ref,          # fco1: [F, 64], [1, 64]
                   wa_ref, ba_ref,          # fca1 (row form): [1, 64], [1, 64]
                   w2a_ref, w2b_ref, b2_ref,  # fc2 split: [64, 64], [64, 64], [1, 64]
                   w3_ref, b3_ref,          # fc3 (row form): [1, 64], [1, 1]
                   out_ref):
    obs = obs_ref[...]                              # (T, F)

    # Lane-dense action row -> column (tiny XLU relayout, T*4 bytes).
    act_col = jnp.transpose(act_ref[0])             # (1, T) -> (T, 1)

    # fco1: the only matmul over the obs feature dim (MXU, K = F).
    out1 = jnp.dot(obs, w1_ref[...], preferred_element_type=jnp.float32) + b1_ref[...]
    out1 = jnp.maximum(out1, 0.0)                    # (T, 64)

    # fca1: Linear(1, 64) is a rank-1 outer product -> VPU broadcast multiply.
    out2 = jnp.maximum(act_col * wa_ref[...] + ba_ref[...], 0.0)   # (T, 64)

    # fc2: concat folded into two K=64 MXU matmuls summed (no (T,128) concat
    # relayout / extra intermediate).
    h = jnp.dot(out1, w2a_ref[...], preferred_element_type=jnp.float32)
    h = h + jnp.dot(out2, w2b_ref[...], preferred_element_type=jnp.float32)
    h = jnp.maximum(h + b2_ref[...], 0.0)            # (T, 64)

    # fc3: N=1 output -> VPU multiply + lane reduce (no single-column MXU op).
    logit = jnp.sum(h * w3_ref[...], axis=-1, keepdims=True) + b3_ref[...]   # (T, 1)
    y = jax.nn.sigmoid(logit)

    # Store lane-dense: (T, 1) -> (1, T) on the XLU, unmasked wide store.
    out_ref[0] = jnp.transpose(y)                    # (1, T)


def _round_up(x, m):
    return ((x + m - 1) // m) * m


def _choose_tile_b(batch, feat):
    # Conservative per-row VMEM footprint (bytes):
    #   obs double buffer                  : 2 * F * 4
    #   (T,64) f32 intermediates (~4 live) : 4 * 64 * 4
    #   lane-padded (T,1) column temps x2  : 2 * 128 * 4
    #   lane-dense act/out double buffers  : ~32
    per_row = 2 * feat * 4 + 4 * HID1 * 4 + 2 * 128 * 4 + 32
    budget = 12 * 1024 * 1024   # fits v5e's 16 MiB scoped default with margin
    t = max(256, budget // per_row)
    # Keep >= 2 grid tiles so the "parallel" batch axis can shard across the
    # two TensorCores on v7x (no-op elsewhere).
    if batch >= 16:
        t = min(t, _round_up(pl.cdiv(batch, 2), 8))
    t = min(t, _round_up(batch, 8))
    return max(8, (t // 8) * 8)


def env_net_forward(obs, action, params, *, tile_b=None):
    obs = jnp.asarray(obs, jnp.float32)
    action = jnp.asarray(action, jnp.float32)
    B_orig, F = obs.shape
    assert action.shape == (B_orig, 1)

    # Tiny-batch guard (keeps every block within the array bounds).
    if B_orig < 8:
        obs = jnp.pad(obs, ((0, 8 - B_orig), (0, 0)))
        action = jnp.pad(action, ((0, 8 - B_orig), (0, 0)))
    B = obs.shape[0]

    if tile_b is None:
        tile_b = _choose_tile_b(B, F)
    tile_b = max(8, (min(int(tile_b), _round_up(B, 8)) // 8) * 8)

    num_tiles = pl.cdiv(B, tile_b)
    b_pad = num_tiles * tile_b

    # Width-1 streams repacked lane-dense: (num_tiles, 1, tile_b).  Only the
    # tiny action vector is padded; the dominant obs stream is NOT copied.
    act_lanes = jnp.pad(action.reshape(B), (0, b_pad - B)).reshape(num_tiles, 1, tile_b)

    in_specs = [
        pl.BlockSpec((tile_b, F), lambda i: (i, 0)),         # obs (streamed)
        pl.BlockSpec((1, 1, tile_b), lambda i: (i, 0, 0)),   # action (lane-dense)
        pl.BlockSpec((F, HID1), lambda i: (0, 0)),           # w1 (VMEM-resident)
        pl.BlockSpec((1, HID1), lambda i: (0, 0)),           # b1
        pl.BlockSpec((1, HID1), lambda i: (0, 0)),           # wa (row)
        pl.BlockSpec((1, HID1), lambda i: (0, 0)),           # ba
        pl.BlockSpec((HID1, HID2), lambda i: (0, 0)),        # w2a = w2[:64]
        pl.BlockSpec((HID1, HID2), lambda i: (0, 0)),        # w2b = w2[64:]
        pl.BlockSpec((1, HID2), lambda i: (0, 0)),           # b2
        pl.BlockSpec((1, HID2), lambda i: (0, 0)),           # w3 (row)
        pl.BlockSpec((1, 1), lambda i: (0, 0)),              # b3
    ]
    out_spec = pl.BlockSpec((1, 1, tile_b), lambda i: (i, 0, 0))   # lane-dense

    out = pl.pallas_call(
        env_net_kernel,
        grid=(num_tiles,),
        in_specs=in_specs,
        out_specs=out_spec,
        out_shape=jax.ShapeDtypeStruct((num_tiles, 1, tile_b), jnp.float32),
        compiler_params=pltpu.CompilerParams(
            dimension_semantics=("parallel",),
            vmem_limit_bytes=32 * 1024 * 1024),
    )(obs, act_lanes,
      params["w1"], params["b1"],
      params["wa"], params["ba"],
      params["w2a"], params["w2b"], params["b2"],
      params["w3"], params["b3"])

    return out.reshape(b_pad, 1)[:B_orig]


def init_params(obs_shape, key):
    """PyTorch Linear default init: U(-1/sqrt(fan_in), 1/sqrt(fan_in))."""
    m, n, p = obs_shape
    F = m * n * p
    ks = jax.random.split(key, 8)

    def lin(kw, kb, fan_in, fan_out):
        bound = 1.0 / jnp.sqrt(jnp.float32(fan_in))
        w = jax.random.uniform(kw, (fan_in, fan_out), jnp.float32, -bound, bound)
        b = jax.random.uniform(kb, (1, fan_out), jnp.float32, -bound, bound)
        return w, b

    w1, b1 = lin(ks[0], ks[1], F, HID1)        # fco1
    wa, ba = lin(ks[2], ks[3], 1, HID1)        # fca1 (wa is already a [1,64] row)
    w2, b2 = lin(ks[4], ks[5], HID_CAT, HID2)  # fc2 (fan_in = 128)
    w3, b3 = lin(ks[6], ks[7], HID2, 1)        # fc3
    return {
        "w1": w1, "b1": b1,
        "wa": wa, "ba": ba,
        "w2a": w2[:HID1], "w2b": w2[HID1:], "b2": b2,
        "w3": jnp.transpose(w3), "b3": b3,     # w3 stored as a [1,64] row
    }


def reference_forward(obs, action, params):
    hp = jax.lax.Precision.HIGHEST
    out1 = jnp.maximum(jnp.dot(obs, params["w1"], precision=hp) + params["b1"], 0.0)
    out2 = jnp.maximum(jnp.dot(action, params["wa"], precision=hp) + params["ba"], 0.0)
    # concat([out1, out2]) @ w2  ==  out1 @ w2[:64] + out2 @ w2[64:]
    h = jnp.maximum(jnp.dot(out1, params["w2a"], precision=hp)
                    + jnp.dot(out2, params["w2b"], precision=hp)
                    + params["b2"], 0.0)
    logit = jnp.dot(h, jnp.transpose(params["w3"]), precision=hp) + params["b3"]
    return jax.nn.sigmoid(logit)


if __name__ == "__main__":
    obs_shape = (4, 4, 4)          # m, n, p -> flattened obs feature dim F = 64
    F = obs_shape[0] * obs_shape[1] * obs_shape[2]

    key = jax.random.PRNGKey(0)
    k_par, k1, k2, k3, k4 = jax.random.split(key, 5)
    params = init_params(obs_shape, k_par)

    # Case 1: tiny batch (single grid step, lane-width == batch).
    B1 = 8
    obs1 = jax.random.normal(k1, (B1, F), jnp.float32)
    act1 = jax.random.normal(k2, (B1, 1), jnp.float32)
    out1 = jax.block_until_ready(env_net_forward(obs1, act1, params))
    ref1 = reference_forward(obs1, act1, params)
    assert out1.shape == (B1, 1)
    assert jnp.allclose(out1, ref1, atol=1e-4, rtol=1e-4), float(jnp.max(jnp.abs(out1 - ref1)))

    # Case 2: batch not divisible by the tile, auto tile sizing
    # (exercises >=2 grid tiles + the unpadded obs boundary block).
    B2 = 300
    obs2 = jax.random.normal(k3, (B2, F), jnp.float32)
    act2 = jax.random.normal(k4, (B2, 1), jnp.float32)
    out2 = jax.block_until_ready(env_net_forward(obs2, act2, params))
    ref2 = reference_forward(obs2, act2, params)
    assert out2.shape == (B2, 1)
    assert jnp.allclose(out2, ref2, atol=1e-4, rtol=1e-4), float(jnp.max(jnp.abs(out2 - ref2)))

    # Case 3: explicit tile override (3 tiles, last one partial).
    out3 = jax.block_until_ready(env_net_forward(obs2, act2, params, tile_b=128))
    assert out3.shape == (B2, 1)
    assert jnp.allclose(out3, ref2, atol=1e-4, rtol=1e-4), float(jnp.max(jnp.abs(out3 - ref2)))

    print("KERNEL_OK")
</pallas_src>

<mosaic_0001>
module attributes {stable_mosaic.version = 11 : i64} {
  func.func @env_net_kernel(%arg0: i32, %arg1: memref<8x64xf32, #tpu.memory_space<vmem>>, %arg2: memref<1x1x8xf32, #tpu.memory_space<vmem>>, %arg3: memref<64x64xf32, #tpu.memory_space<vmem>>, %arg4: memref<1x64xf32, #tpu.memory_space<vmem>>, %arg5: memref<1x64xf32, #tpu.memory_space<vmem>>, %arg6: memref<1x64xf32, #tpu.memory_space<vmem>>, %arg7: memref<64x64xf32, #tpu.memory_space<vmem>>, %arg8: memref<64x64xf32, #tpu.memory_space<vmem>>, %arg9: memref<1x64xf32, #tpu.memory_space<vmem>>, %arg10: memref<1x64xf32, #tpu.memory_space<vmem>>, %arg11: memref<1x1xf32, #tpu.memory_space<vmem>>, %arg12: memref<1x1x8xf32, #tpu.memory_space<vmem>>) attributes {dimension_semantics = [#tpu.dimension_semantics<parallel>], iteration_bounds = array<i64: 1>, scalar_prefetch = 0 : i64, scratch_operands = 0 : i64, tpu.core_type = #tpu.core_type<tc>, window_params = [{transform_indices = @transform_0, window_bounds = array<i64: 8, 64>}, {transform_indices = @transform_1, window_bounds = array<i64: 1, 1, 8>}, {pipeline_mode = #tpu.pipeline_mode<synchronous>, transform_indices = @transform_2, window_bounds = array<i64: 64, 64>}, {pipeline_mode = #tpu.pipeline_mode<synchronous>, transform_indices = @transform_3, window_bounds = array<i64: 1, 64>}, {pipeline_mode = #tpu.pipeline_mode<synchronous>, transform_indices = @transform_4, window_bounds = array<i64: 1, 64>}, {pipeline_mode = #tpu.pipeline_mode<synchronous>, transform_indices = @transform_5, window_bounds = array<i64: 1, 64>}, {pipeline_mode = #tpu.pipeline_mode<synchronous>, transform_indices = @transform_6, window_bounds = array<i64: 64, 64>}, {pipeline_mode = #tpu.pipeline_mode<synchronous>, transform_indices = @transform_7, window_bounds = array<i64: 64, 64>}, {pipeline_mode = #tpu.pipeline_mode<synchronous>, transform_indices = @transform_8, window_bounds = array<i64: 1, 64>}, {pipeline_mode = #tpu.pipeline_mode<synchronous>, transform_indices = @transform_9, window_bounds = array<i64: 1, 64>}, {pipeline_mode = #tpu.pipeline_mode<synchronous>, transform_indices = @transform_10, window_bounds = array<i64: 1, 1>}, {transform_indices = @transform_11, window_bounds = array<i64: 1, 1, 8>}]} {
    %c0 = arith.constant 0 : index
    %c0_0 = arith.constant 0 : index
    %0 = vector.load %arg1[%c0, %c0_0] : memref<8x64xf32, #tpu.memory_space<vmem>>, vector<8x64xf32>
    %c0_1 = arith.constant 0 : index
    %c0_2 = arith.constant 0 : index
    %c0_3 = arith.constant 0 : index
    %1 = vector.load %arg2[%c0_1, %c0_2, %c0_3] : memref<1x1x8xf32, #tpu.memory_space<vmem>>, vector<1x1x8xf32>
    %2 = vector.shape_cast %1 : vector<1x1x8xf32> to vector<1x8xf32>
    %3 = tpu.transpose %2, [1, 0] : vector<1x8xf32> -> vector<8x1xf32>
    %c0_4 = arith.constant 0 : index
    %c0_5 = arith.constant 0 : index
    %4 = vector.load %arg3[%c0_4, %c0_5] : memref<64x64xf32, #tpu.memory_space<vmem>>, vector<64x64xf32>
    %cst = arith.constant dense<0.000000e+00> : vector<8x64xf32>
    %5 = tpu.matmul %0, %4, %cst {dimension_numbers = #tpu.dot_dimension_numbers<[1], [0], [0], [1], [0, 0, 1, 1], [], []>} : vector<8x64xf32>, vector<64x64xf32>, vector<8x64xf32> -> vector<8x64xf32>
    %c0_6 = arith.constant 0 : index
    %c0_7 = arith.constant 0 : index
    %6 = vector.load %arg4[%c0_6, %c0_7] : memref<1x64xf32, #tpu.memory_space<vmem>>, vector<1x64xf32>
    %7 = vector.broadcast %6 : vector<1x64xf32> to vector<8x64xf32>
    %8 = arith.addf %5, %7 : vector<8x64xf32>
    %cst_8 = arith.constant 0.000000e+00 : f32
    %9 = vector.broadcast %cst_8 : f32 to vector<8x64xf32>
    %10 = arith.maximumf %8, %9 : vector<8x64xf32>
    %c0_9 = arith.constant 0 : index
    %c0_10 = arith.constant 0 : index
    %11 = vector.load %arg5[%c0_9, %c0_10] : memref<1x64xf32, #tpu.memory_space<vmem>>, vector<1x64xf32>
    %12 = vector.broadcast %3 : vector<8x1xf32> to vector<8x64xf32>
    %13 = vector.broadcast %11 : vector<1x64xf32> to vector<8x64xf32>
    %14 = arith.mulf %12, %13 : vector<8x64xf32>
    %c0_11 = arith.constant 0 : index
    %c0_12 = arith.constant 0 : index
    %15 = vector.load %arg6[%c0_11, %c0_12] : memref<1x64xf32, #tpu.memory_space<vmem>>, vector<1x64xf32>
    %16 = vector.broadcast %15 : vector<1x64xf32> to vector<8x64xf32>
    %17 = arith.addf %14, %16 : vector<8x64xf32>
    %cst_13 = arith.constant 0.000000e+00 : f32
    %18 = vector.broadcast %cst_13 : f32 to vector<8x64xf32>
    %19 = arith.maximumf %17, %18 : vector<8x64xf32>
    %c0_14 = arith.constant 0 : index
    %c0_15 = arith.constant 0 : index
    %20 = vector.load %arg7[%c0_14, %c0_15] : memref<64x64xf32, #tpu.memory_space<vmem>>, vector<64x64xf32>
    %cst_16 = arith.constant dense<0.000000e+00> : vector<8x64xf32>
    %21 = tpu.matmul %10, %20, %cst_16 {dimension_numbers = #tpu.dot_dimension_numbers<[1], [0], [0], [1], [0, 0, 1, 1], [], []>} : vector<8x64xf32>, vector<64x64xf32>, vector<8x64xf32> -> vector<8x64xf32>
    %c0_17 = arith.constant 0 : index
    %c0_18 = arith.constant 0 : index
    %22 = vector.load %arg8[%c0_17, %c0_18] : memref<64x64xf32, #tpu.memory_space<vmem>>, vector<64x64xf32>
    %cst_19 = arith.constant dense<0.000000e+00> : vector<8x64xf32>
    %23 = tpu.matmul %19, %22, %cst_19 {dimension_numbers = #tpu.dot_dimension_numbers<[1], [0], [0], [1], [0, 0, 1, 1], [], []>} : vector<8x64xf32>, vector<64x64xf32>, vector<8x64xf32> -> vector<8x64xf32>
    %24 = arith.addf %21, %23 : vector<8x64xf32>
    %c0_20 = arith.constant 0 : index
    %c0_21 = arith.constant 0 : index
    %25 = vector.load %arg9[%c0_20, %c0_21] : memref<1x64xf32, #tpu.memory_space<vmem>>, vector<1x64xf32>
    %26 = vector.broadcast %25 : vector<1x64xf32> to vector<8x64xf32>
    %27 = arith.addf %24, %26 : vector<8x64xf32>
    %cst_22 = arith.constant 0.000000e+00 : f32
    %28 = vector.broadcast %cst_22 : f32 to vector<8x64xf32>
    %29 = arith.maximumf %27, %28 : vector<8x64xf32>
    %c0_23 = arith.constant 0 : index
    %c0_24 = arith.constant 0 : index
    %30 = vector.load %arg10[%c0_23, %c0_24] : memref<1x64xf32, #tpu.memory_space<vmem>>, vector<1x64xf32>
    %31 = vector.broadcast %30 : vector<1x64xf32> to vector<8x64xf32>
    %32 = arith.mulf %29, %31 : vector<8x64xf32>
    %cst_25 = arith.constant dense<0.000000e+00> : vector<8xf32>
    %33 = vector.multi_reduction <add>, %32, %cst_25 [1] : vector<8x64xf32> to vector<8xf32>
    %34 = vector.shape_cast %33 : vector<8xf32> to vector<8x1xf32>
    %c0_26 = arith.constant 0 : index
    %c0_27 = arith.constant 0 : index
    %35 = vector.load %arg11[%c0_26, %c0_27] : memref<1x1xf32, #tpu.memory_space<vmem>>, vector<1x1xf32>
    %36 = vector.broadcast %35 : vector<1x1xf32> to vector<8x1xf32>
    %37 = arith.addf %34, %36 : vector<8x1xf32>
    %38 = arith.negf %37 : vector<8x1xf32>
    %39 = math.exp %38 : vector<8x1xf32>
    %cst_28 = arith.constant 1.000000e+00 : f32
    %40 = vector.broadcast %cst_28 : f32 to vector<8x1xf32>
    %41 = arith.addf %40, %39 : vector<8x1xf32>
    %42 = arith.divf %40, %41 : vector<8x1xf32>
    %43 = tpu.transpose %42, [1, 0] : vector<8x1xf32> -> vector<1x8xf32>
    %c0_29 = arith.constant 0 : index
    %c0_30 = arith.constant 0 : index
    %c0_31 = arith.constant 0 : index
    %44 = vector.load %arg12[%c0_29, %c0_30, %c0_31] : memref<1x1x8xf32, #tpu.memory_space<vmem>>, vector<1x1x8xf32>
    %45 = vector.shape_cast %44 : vector<1x1x8xf32> to vector<1x8xf32>
    %46 = vector.shape_cast %43 : vector<1x8xf32> to vector<1x1x8xf32>
    tpu.vector_store %arg12[%c0_29, %c0_30, %c0_31], %46 {strides = array<i32>} : memref<1x1x8xf32, #tpu.memory_space<vmem>>, vector<1x1x8xf32>,
    return
  }
  func.func @transform_0(%arg0: i32) -> (i32, i32) {
    %c0_i32 = arith.constant 0 : i32
    %c0_i32_0 = arith.constant 0 : i32
    return %arg0, %c0_i32 : i32, i32
  }
  func.func @transform_1(%arg0: i32) -> (i32, i32, i32) {
    %c0_i32 = arith.constant 0 : i32
    %c0_i32_0 = arith.constant 0 : i32
    %c0_i32_1 = arith.constant 0 : i32
    return %arg0, %c0_i32, %c0_i32_0 : i32, i32, i32
  }
  func.func @transform_2(%arg0: i32) -> (i32, i32) {
    %c0_i32 = arith.constant 0 : i32
    %c0_i32_0 = arith.constant 0 : i32
    %c0_i32_1 = arith.constant 0 : i32
    return %c0_i32, %c0_i32_0 : i32, i32
  }
  func.func @transform_3(%arg0: i32) -> (i32, i32) {
    %c0_i32 = arith.constant 0 : i32
    %c0_i32_0 = arith.constant 0 : i32
    %c0_i32_1 = arith.constant 0 : i32
    return %c0_i32, %c0_i32_0 : i32, i32
  }
  func.func @transform_4(%arg0: i32) -> (i32, i32) {
    %c0_i32 = arith.constant 0 : i32
    %c0_i32_0 = arith.constant 0 : i32
    %c0_i32_1 = arith.constant 0 : i32
    return %c0_i32, %c0_i32_0 : i32, i32
  }
  func.func @transform_5(%arg0: i32) -> (i32, i32) {
    %c0_i32 = arith.constant 0 : i32
    %c0_i32_0 = arith.constant 0 : i32
    %c0_i32_1 = arith.constant 0 : i32
    return %c0_i32, %c0_i32_0 : i32, i32
  }
  func.func @transform_6(%arg0: i32) -> (i32, i32) {
    %c0_i32 = arith.constant 0 : i32
    %c0_i32_0 = arith.constant 0 : i32
    %c0_i32_1 = arith.constant 0 : i32
    return %c0_i32, %c0_i32_0 : i32, i32
  }
  func.func @transform_7(%arg0: i32) -> (i32, i32) {
    %c0_i32 = arith.constant 0 : i32
    %c0_i32_0 = arith.constant 0 : i32
    %c0_i32_1 = arith.constant 0 : i32
    return %c0_i32, %c0_i32_0 : i32, i32
  }
  func.func @transform_8(%arg0: i32) -> (i32, i32) {
    %c0_i32 = arith.constant 0 : i32
    %c0_i32_0 = arith.constant 0 : i32
    %c0_i32_1 = arith.constant 0 : i32
    return %c0_i32, %c0_i32_0 : i32, i32
  }
  func.func @transform_9(%arg0: i32) -> (i32, i32) {
    %c0_i32 = arith.constant 0 : i32
    %c0_i32_0 = arith.constant 0 : i32
    %c0_i32_1 = arith.constant 0 : i32
    return %c0_i32, %c0_i32_0 : i32, i32
  }
  func.func @transform_10(%arg0: i32) -> (i32, i32) {
    %c0_i32 = arith.constant 0 : i32
    %c0_i32_0 = arith.constant 0 : i32
    %c0_i32_1 = arith.constant 0 : i32
    return %c0_i32, %c0_i32_0 : i32, i32
  }
  func.func @transform_11(%arg0: i32) -> (i32, i32, i32) {
    %c0_i32 = arith.constant 0 : i32
    %c0_i32_0 = arith.constant 0 : i32
    %c0_i32_1 = arith.constant 0 : i32
    return %arg0, %c0_i32, %c0_i32_0 : i32, i32, i32
  }
}

</mosaic_0001>

<llo_original>
// kernel: tpu_custom_call.1
$region0: #{tpu_custom_call.1}
  #allocation0 [shape = 'u32[]', space=smem, size = 0x4, offset = 0x4, fixed_abs, tag = 'smem constant byte address 0x4 - core index']
  #allocation1 [shape = 'u32[144,128]{1,0:T(1,128)}', space=vmem, size = 0x12000, scoped, tag = 'internal scratch']
  #allocation2 [shape = 'f32[1,1]{1,0:T(1,128)S(1)}', space=vmem, size = 0x200, scoped, tag = 'scoped memory for tpu_custom_call.1']
  %s0 = inlined_call_operand.hbm [shape: f32[8,64], index: 0, kind: input, shape index: {}]
  %s1 = inlined_call_operand.vmem [shape: f32[1,1,8], index: 1, kind: input, shape index: {}]
  %s2 = inlined_call_operand.hbm [shape: f32[64,64], index: 2, kind: input, shape index: {}]
  %s3 = inlined_call_operand.vmem [shape: f32[1,64], index: 3, kind: input, shape index: {}]
  %s4 = inlined_call_operand.vmem [shape: f32[1,64], index: 4, kind: input, shape index: {}]
  %s5 = inlined_call_operand.vmem [shape: f32[1,64], index: 5, kind: input, shape index: {}]
  %s6 = inlined_call_operand.hbm [shape: f32[64,64], index: 6, kind: input, shape index: {}]
  %s7 = inlined_call_operand.hbm [shape: f32[64,64], index: 7, kind: input, shape index: {}]
  %s8 = inlined_call_operand.vmem [shape: f32[1,64], index: 8, kind: input, shape index: {}]
  %s9 = inlined_call_operand.vmem [shape: f32[1,64], index: 9, kind: input, shape index: {}]
  %s10 = inlined_call_operand.<no memory space> [shape: f32[1,1], index: 10, kind: input, shape index: {}]
  %s11 = inlined_call_operand.hbm [shape: f32[1,1,8], index: 11, kind: output, shape index: {}]
  %s12 = sld [smem:[#allocation0]]
  $region70: #{tpu_custom_call.1} parent=0
    _
  %s14 = ssub.s32 1, %s12
  %s15 = scalar_select 0, %s14, %s12
  %v16 = vstv %s10
  %17 = vst [vmem:[#allocation2] sm:$0x1] %v16
  $region1: #{tpu_custom_call.1} parent=0
    #allocation3 [shape = 'u8[4096]{0}', space=vmem, size = 0x1000, scoped, tag = 'input window, operand 0, single buffered']
    #allocation4 [shape = 's32[1]{0}', space=sflag, size = 0x4, scoped, tag = 'scoped memory for tpu_custom_call.1']
    #allocation5 [shape = 's32[1]{0}', space=sflag, size = 0x4, scoped, tag = 'scoped memory for tpu_custom_call.1']
    #allocation6 [shape = 'u8[32768]{0}', space=vmem, size = 0x8000, scoped, tag = 'input window, operand 2, single buffered']
    #allocation7 [shape = 's32[1]{0}', space=sflag, size = 0x4, scoped, tag = 'scoped memory for tpu_custom_call.1']
    #allocation8 [shape = 'u8[32768]{0}', space=vmem, size = 0x8000, scoped, tag = 'input window, operand 6, single buffered']
    #allocation9 [shape = 'u8[32768]{0}', space=vmem, size = 0x8000, scoped, tag = 'input window, operand 7, single buffered']
    #allocation10 [shape = 's32[1]{0}', space=sflag, size = 0x4, scoped, tag = 'scoped memory for tpu_custom_call.1']
    #allocation11 [shape = 'u8[512]{0}', space=vmem, size = 0x400, scoped, tag = 'output window, operand 0, single buffered']
    %18 = vsyncpa [#allocation4], 0
    %19 = vsyncpa [#allocation7], 0
    %20 = vsyncpa [#allocation10], 0
    %21 = vsyncpa [#allocation5], 0
    // Predicated region
    $region2: #{tpu_custom_call.1} parent=1 // pred_check
      _
    $region3: #{tpu_custom_call.1} parent=1 // pred_check_branch
      %23 = sbr.rel (0) target = $region5
    $region4: #{tpu_custom_call.1} parent=1 // pred_region
      %s25 = ssub.s32 128, 128
      %26 = vsyncadd [#allocation4], %s25
      %s28 = sshll.u32 [#allocation3], 4
      %s29 = int_to_ptr.vmem [resolvable:$true] %s28
      %31 = dma.hbm_to_vmem [thread:$0]  %s0, 128, %s29, [#allocation4]
    $region5: #{tpu_custom_call.1} parent=1 // pred_fallthru
      _
    // Predicated region
    $region6: #{tpu_custom_call.1} parent=1 // pred_check
      _
    $region7: #{tpu_custom_call.1} parent=1 // pred_check_branch
      %33 = sbr.rel (0) target = $region9
    $region8: #{tpu_custom_call.1} parent=1 // pred_region
      _
    $region9: #{tpu_custom_call.1} parent=1 // pred_fallthru
      _
    // Predicated region
    $region10: #{tpu_custom_call.1} parent=1 // pred_check
      _
    $region11: #{tpu_custom_call.1} parent=1 // pred_check_branch
      %35 = sbr.rel (0) target = $region13
    $region12: #{tpu_custom_call.1} parent=1 // pred_region
      %s37 = ssub.s32 1024, 1024
      %38 = vsyncadd [#allocation7], %s37
      %s39 = sshll.u32 [#allocation6], 4
      %s40 = int_to_ptr.vmem [resolvable:$true] %s39
      %45 = dma.hbm_to_vmem [thread:$0]  %s2, 1024, %s40, [#allocation7], 128, 128, 8
    $region13: #{tpu_custom_call.1} parent=1 // pred_fallthru
      _
    // Predicated region
    $region14: #{tpu_custom_call.1} parent=1 // pred_check
      _
    $region15: #{tpu_custom_call.1} parent=1 // pred_check_branch
      %47 = sbr.rel (0) target = $region17
    $region16: #{tpu_custom_call.1} parent=1 // pred_region
      _
    $region17: #{tpu_custom_call.1} parent=1 // pred_fallthru
      _
    // Predicated region
    $region18: #{tpu_custom_call.1} parent=1 // pred_check
      _
    $region19: #{tpu_custom_call.1} parent=1 // pred_check_branch
      %49 = sbr.rel (0) target = $region21
    $region20: #{tpu_custom_call.1} parent=1 // pred_region
      _
    $region21: #{tpu_custom_call.1} parent=1 // pred_fallthru
      _
    // Predicated region
    $region22: #{tpu_custom_call.1} parent=1 // pred_check
      _
    $region23: #{tpu_custom_call.1} parent=1 // pred_check_branch
      %51 = sbr.rel (0) target = $region25
    $region24: #{tpu_custom_call.1} parent=1 // pred_region
      _
    $region25: #{tpu_custom_call.1} parent=1 // pred_fallthru
      _
    // Predicated region
    $region26: #{tpu_custom_call.1} parent=1 // pred_check
      _
    $region27: #{tpu_custom_call.1} parent=1 // pred_check_branch
      %53 = sbr.rel (0) target = $region29
    $region28: #{tpu_custom_call.1} parent=1 // pred_region
      %s55 = ssub.s32 1024, 1024
      %56 = vsyncadd [#allocation7], %s55
      %s57 = sshll.u32 [#allocation8], 4
      %s58 = int_to_ptr.vmem [resolvable:$true] %s57
      %63 = dma.hbm_to_vmem [thread:$0]  %s6, 1024, %s58, [#allocation7], 128, 128, 8
    $region29: #{tpu_custom_call.1} parent=1 // pred_fallthru
      _
    // Predicated region
    $region30: #{tpu_custom_call.1} parent=1 // pred_check
      _
    $region31: #{tpu_custom_call.1} parent=1 // pred_check_branch
      %65 = sbr.rel (0) target = $region33
    $region32: #{tpu_custom_call.1} parent=1 // pred_region
      %s67 = ssub.s32 1024, 1024
      %68 = vsyncadd [#allocation10], %s67
      %s69 = sshll.u32 [#allocation9], 4
      %s70 = int_to_ptr.vmem [resolvable:$true] %s69
      %75 = dma.hbm_to_vmem [thread:$0]  %s7, 1024, %s70, [#allocation10], 128, 128, 8
    $region33: #{tpu_custom_call.1} parent=1 // pred_fallthru
      _
    // Predicated region
    $region34: #{tpu_custom_call.1} parent=1 // pred_check
      _
    $region35: #{tpu_custom_call.1} parent=1 // pred_check_branch
      %77 = sbr.rel (0) target = $region37
    $region36: #{tpu_custom_call.1} parent=1 // pred_region
      _
    $region37: #{tpu_custom_call.1} parent=1 // pred_fallthru
      _
    // Predicated region
    $region38: #{tpu_custom_call.1} parent=1 // pred_check
      _
    $region39: #{tpu_custom_call.1} parent=1 // pred_check_branch
      %79 = sbr.rel (0) target = $region41
    $region40: #{tpu_custom_call.1} parent=1 // pred_region
      _
    $region41: #{tpu_custom_call.1} parent=1 // pred_fallthru
      _
    // Predicated region
    $region42: #{tpu_custom_call.1} parent=1 // pred_check
      _
    $region43: #{tpu_custom_call.1} parent=1 // pred_check_branch
      %81 = sbr.rel (0) target = $region45
    $region44: #{tpu_custom_call.1} parent=1 // pred_region
      _
    $region45: #{tpu_custom_call.1} parent=1 // pred_fallthru
      _
    // Predicated region
    $region46: #{tpu_custom_call.1} parent=1 // pred_check
      _
    $region47: #{tpu_custom_call.1} parent=1 // pred_check_branch
      %83 = sbr.rel (0) target = $region49
    $region48: #{tpu_custom_call.1} parent=1 // pred_region
      %84 = dma.done [#allocation4], 128
    $region49: #{tpu_custom_call.1} parent=1 // pred_fallthru
      _
    // Predicated region
    $region50: #{tpu_custom_call.1} parent=1 // pred_check
      _
    $region51: #{tpu_custom_call.1} parent=1 // pred_check_branch
      %86 = sbr.rel (0) target = $region53
    $region52: #{tpu_custom_call.1} parent=1 // pred_region
      %87 = dma.done [#allocation7], 1024
    $region53: #{tpu_custom_call.1} parent=1 // pred_fallthru
      _
    // Predicated region
    $region54: #{tpu_custom_call.1} parent=1 // pred_check
      _
    $region55: #{tpu_custom_call.1} parent=1 // pred_check_branch
      %89 = sbr.rel (0) target = $region57
    $region56: #{tpu_custom_call.1} parent=1 // pred_region
      %90 = dma.done [#allocation7], 1024
    $region57: #{tpu_custom_call.1} parent=1 // pred_fallthru
      _
    // Predicated region
    $region58: #{tpu_custom_call.1} parent=1 // pred_check
      _
    $region59: #{tpu_custom_call.1} parent=1 // pred_check_branch
      %92 = sbr.rel (0) target = $region61
    $region60: #{tpu_custom_call.1} parent=1 // pred_region
      %93 = dma.done [#allocation10], 1024
    $region61: #{tpu_custom_call.1} parent=1 // pred_fallthru
      _
    %v94 = vld [vmem:[#allocation3] sm:$0xff]
    %v95 = vld [vmem:[%s1] sm:$0x1]
    %96 = vxpose.xlu0.b32.start [1/16] %v95, 128
    %97 = vxpose.xlu0.b32.cont [2/16] 0.0, 128
    %98 = vxpose.xlu0.b32.cont [3/16] 0.0, 128
    %99 = vxpose.xlu0.b32.cont [4/16] 0.0, 128
    %100 = vxpose.xlu0.b32.cont [5/16] 0.0, 128
    %101 = vxpose.xlu0.b32.cont [6/16] 0.0, 128
    %102 = vxpose.xlu0.b32.cont [7/16] 0.0, 128
    %103 = vxpose.xlu0.b32.cont [8/16] 0.0, 128
    %104 = vxpose.xlu0.b32.cont [9/16] 0.0, 128
    %105 = vxpose.xlu0.b32.cont [10/16] 0.0, 128
    %106 = vxpose.xlu0.b32.cont [11/16] 0.0, 128
    %107 = vxpose.xlu0.b32.cont [12/16] 0.0, 128
    %108 = vxpose.xlu0.b32.cont [13/16] 0.0, 128
    %109 = vxpose.xlu0.b32.cont [14/16] 0.0, 128
    %110 = vxpose.xlu0.b32.cont [15/16] 0.0, 128
    %111 = vxpose.xlu0.b32.end [16/16] 0.0, 128
    %v112 = vpop.trf.xlu0
    %v113 = vpop.trf.xlu0
    %v114 = vpop.trf.xlu0
    %v115 = vpop.trf.xlu0
    %v116 = vpop.trf.xlu0
    %v117 = vpop.trf.xlu0
    %v118 = vpop.trf.xlu0
    %v119 = vpop.trf.xlu0
    %v120 = vpop.trf.xlu0
    %v121 = vpop.trf.xlu0
    %v122 = vpop.trf.xlu0
    %v123 = vpop.trf.xlu0
    %v124 = vpop.trf.xlu0
    %v125 = vpop.trf.xlu0
    %v126 = vpop.trf.xlu0
    %v127 = vpop.trf.xlu0
    %v128 = vld [vmem:[#allocation6] sm:$0xff]
    %v129 = vld [vmem:[#allocation6 + $0x8] sm:$0xff]
    %v130 = vld [vmem:[#allocation6 + $0x10] sm:$0xff]
    %v131 = vld [vmem:[#allocation6 + $0x18] sm:$0xff]
    %v132 = vld [vmem:[#allocation6 + $0x20] sm:$0xff]
    %v133 = vld [vmem:[#allocation6 + $0x28] sm:$0xff]
    %v134 = vld [vmem:[#allocation6 + $0x30] sm:$0xff]
    %v135 = vld [vmem:[#allocation6 + $0x38] sm:$0xff]
    %v136 = vld [vmem:[%s3] sm:$0x1]
    %v138 = vlaneseq
    %v139 = vshrl.u32 %v138, 7
    %v140 = vsub.s32 0, %v139
    %v141 = vrot.slane %v136, %v140
    %vm143 = vcmask 523264
    %v145 = vsel %vm143, %v94, 0
    %147 = vmatprep.subr.mxu0 0.0
    %148 = vmatpush1.msra.mxu0 0.0
    %149 = vmatprep.subr.mxu0 0.0
    %150 = vmatpush1.msra.mxu0 0.0
    %151 = vmatprep.subr.mxu0 0.0
    %152 = vmatpush1.msra.mxu0 0.0
    %153 = vmatprep.subr.mxu0 0.0
    %154 = vmatpush1.msra.mxu0 0.0
    %155 = vmatprep.subr.mxu0 0.0
    %156 = vmatpush1.msra.mxu0 0.0
    %157 = vmatprep.subr.mxu0 0.0
    %158 = vmatpush1.msra.mxu0 0.0
    %159 = vmatprep.subr.mxu0 0.0
    %160 = vmatpush1.msra.mxu0 0.0
    %161 = vmatprep.subr.mxu0 0.0
    %162 = vmatpush1.msra.mxu0 0.0
    %163 = vmatprep.subr.mxu0 0.0
    %164 = vmatpush1.msra.mxu0 %v135
    %165 = vmatprep.subr.mxu0 0.0
    %166 = vmatpush1.msra.mxu0 %v134
    %167 = vmatprep.subr.mxu0 0.0
    %168 = vmatpush1.msra.mxu0 %v133
    %169 = vmatprep.subr.mxu0 0.0
    %170 = vmatpush1.msra.mxu0 %v132
    %171 = vmatprep.subr.mxu0 0.0
    %172 = vmatpush1.msra.mxu0 %v131
    %173 = vmatprep.subr.mxu0 0.0
    %174 = vmatpush1.msra.mxu0 %v130
    %175 = vmatprep.subr.mxu0 0.0
    %176 = vmatpush1.msra.mxu0 %v129
    %177 = vmatprep.subr.mxu0 0.0
    %178 = vmatpush1.msra.mxu0 %v128
    %179 = vmatprep.subr.mxu0 0.0
    %180 = vmatpush2.msra.mxu0 0.0
    %181 = vmatprep.subr.mxu0 0.0
    %182 = vmatpush2.msra.mxu0 0.0
    %183 = vmatprep.subr.mxu0 0.0
    %184 = vmatpush2.msra.mxu0 0.0
    %185 = vmatprep.subr.mxu0 0.0
    %186 = vmatpush2.msra.mxu0 0.0
    %187 = vmatprep.subr.mxu0 0.0
    %188 = vmatpush2.msra.mxu0 0.0
    %189 = vmatprep.subr.mxu0 0.0
    %190 = vmatpush2.msra.mxu0 0.0
    %191 = vmatprep.subr.mxu0 0.0
    %192 = vmatpush2.msra.mxu0 0.0
    %193 = vmatprep.subr.mxu0 0.0
    %194 = vmatpush2.msra.mxu0 0.0
    %195 = vmatprep.subr.mxu0 0.0
    %196 = vmatpush2.msra.mxu0 0.0
    %197 = vmatprep.subr.mxu0 0.0
    %198 = vmatpush2.msra.mxu0 0.0
    %199 = vmatprep.subr.mxu0 0.0
    %200 = vmatpush2.msra.mxu0 0.0
    %201 = vmatprep.subr.mxu0 0.0
    %202 = vmatpush2.msra.mxu0 0.0
    %203 = vmatprep.subr.mxu0 0.0
    %204 = vmatpush2.msra.mxu0 0.0
    %205 = vmatprep.subr.mxu0 0.0
    %206 = vmatpush2.msra.mxu0 0.0
    %207 = vmatprep.subr.mxu0 0.0
    %208 = vmatpush2.msra.mxu0 0.0
    %209 = vmatprep.subr.mxu0 0.0
    %210 = vmatpush2.msra.mxu0 0.0
    %211 = vmatprep.mubr.f32.mxu0 0.0
    %212 = vmatmul.mubr.f32.gmra.mxu0 %v145
    %v213 = vpop.f32.mrf.mxu0
    %v214 = vadd.f32 %v141, %v213
    %v215 = vpop.f32.mrf.mxu0
    %216 = vdwg.mxu0
    %v217 = vmax.f32 %v214, 0.0
    %v218 = vld [vmem:[%s4] sm:$0x1]
    %220 = vset.pattern.permute.xlu0 0
    %221 = vperm.xlu0 %220, %v112
    %v222 = vpop.permute.xlu0 %221
    %v225 = vlaneseq
    %v226 = vshrl.u32 %v225, 7
    %v227 = vsub.s32 0, %v226
    %v228 = vrot.slane %v218, %v227
    %v230 = vmul.f32 %v222, %v228
    %v231 = vld [vmem:[%s5] sm:$0x1]
    %v233 = vlaneseq
    %v234 = vshrl.u32 %v233, 7
    %v235 = vsub.s32 0, %v234
    %v236 = vrot.slane %v231, %v235
    %v238 = vadd.f32 %v230, %v236
    %v239 = vmax.f32 %v238, 0.0
    %v240 = vld [vmem:[#allocation8] sm:$0xff]
    %v241 = vld [vmem:[#allocation8 + $0x8] sm:$0xff]
    %v242 = vld [vmem:[#allocation8 + $0x10] sm:$0xff]
    %v243 = vld [vmem:[#allocation8 + $0x18] sm:$0xff]
    %v244 = vld [vmem:[#allocation8 + $0x20] sm:$0xff]
    %v245 = vld [vmem:[#allocation8 + $0x28] sm:$0xff]
    %v246 = vld [vmem:[#allocation8 + $0x30] sm:$0xff]
    %v247 = vld [vmem:[#allocation8 + $0x38] sm:$0xff]
    %v248 = vld [vmem:[#allocation9] sm:$0xff]
    %v249 = vld [vmem:[#allocation9 + $0x8] sm:$0xff]
    %v250 = vld [vmem:[#allocation9 + $0x10] sm:$0xff]
    %v251 = vld [vmem:[#allocation9 + $0x18] sm:$0xff]
    %v252 = vld [vmem:[#allocation9 + $0x20] sm:$0xff]
    %v253 = vld [vmem:[#allocation9 + $0x28] sm:$0xff]
    %v254 = vld [vmem:[#allocation9 + $0x30] sm:$0xff]
    %v255 = vld [vmem:[#allocation9 + $0x38] sm:$0xff]
    %v257 = vsel %vm143, %v239, 0
    %259 = vmatprep.subr.mxu0 0.0
    %260 = vmatpush1.msra.mxu0 0.0
    %261 = vmatprep.subr.mxu0 0.0
    %262 = vmatpush1.msra.mxu0 0.0
    %263 = vmatprep.subr.mxu0 0.0
    %264 = vmatpush1.msra.mxu0 0.0
    %265 = vmatprep.subr.mxu0 0.0
    %266 = vmatpush1.msra.mxu0 0.0
    %267 = vmatprep.subr.mxu0 0.0
    %268 = vmatpush1.msra.mxu0 0.0
    %269 = vmatprep.subr.mxu0 0.0
    %270 = vmatpush1.msra.mxu0 0.0
    %271 = vmatprep.subr.mxu0 0.0
    %272 = vmatpush1.msra.mxu0 0.0
    %273 = vmatprep.subr.mxu0 0.0
    %274 = vmatpush1.msra.mxu0 0.0
    %275 = vmatprep.subr.mxu0 0.0
    %276 = vmatpush1.msra.mxu0 %v255
    %277 = vmatprep.subr.mxu0 0.0
    %278 = vmatpush1.msra.mxu0 %v254
    %279 = vmatprep.subr.mxu0 0.0
    %280 = vmatpush1.msra.mxu0 %v253
    %281 = vmatprep.subr.mxu0 0.0
    %282 = vmatpush1.msra.mxu0 %v252
    %283 = vmatprep.subr.mxu0 0.0
    %284 = vmatpush1.msra.mxu0 %v251
    %285 = vmatprep.subr.mxu0 0.0
    %286 = vmatpush1.msra.mxu0 %v250
    %287 = vmatprep.subr.mxu0 0.0
    %288 = vmatpush1.msra.mxu0 %v249
    %289 = vmatprep.subr.mxu0 0.0
    %290 = vmatpush1.msra.mxu0 %v248
    %291 = vmatprep.subr.mxu0 0.0
    %292 = vmatpush2.msra.mxu0 0.0
    %293 = vmatprep.subr.mxu0 0.0
    %294 = vmatpush2.msra.mxu0 0.0
    %295 = vmatprep.subr.mxu0 0.0
    %296 = vmatpush2.msra.mxu0 0.0
    %297 = vmatprep.subr.mxu0 0.0
    %298 = vmatpush2.msra.mxu0 0.0
    %299 = vmatprep.subr.mxu0 0.0
    %300 = vmatpush2.msra.mxu0 0.0
    %301 = vmatprep.subr.mxu0 0.0
    %302 = vmatpush2.msra.mxu0 0.0
    %303 = vmatprep.subr.mxu0 0.0
    %304 = vmatpush2.msra.mxu0 0.0
    %305 = vmatprep.subr.mxu0 0.0
    %306 = vmatpush2.msra.mxu0 0.0
    %307 = vmatprep.subr.mxu0 0.0
    %308 = vmatpush2.msra.mxu0 0.0
    %309 = vmatprep.subr.mxu0 0.0
    %310 = vmatpush2.msra.mxu0 0.0
    %311 = vmatprep.subr.mxu0 0.0
    %312 = vmatpush2.msra.mxu0 0.0
    %313 = vmatprep.subr.mxu0 0.0
    %314 = vmatpush2.msra.mxu0 0.0
    %315 = vmatprep.subr.mxu0 0.0
    %316 = vmatpush2.msra.mxu0 0.0
    %317 = vmatprep.subr.mxu0 0.0
    %318 = vmatpush2.msra.mxu0 0.0
    %319 = vmatprep.subr.mxu0 0.0
    %320 = vmatpush2.msra.mxu0 0.0
    %321 = vmatprep.subr.mxu0 0.0
    %322 = vmatpush2.msra.mxu0 0.0
    %323 = vmatprep.mubr.f32.mxu0 0.0
    %324 = vmatmul.mubr.f32.gmra.mxu0 %v257
    %v325 = vpop.f32.mrf.mxu0
    %v326 = vadd.f32 0.0, %v325
    %v327 = vpop.f32.mrf.mxu0
    %328 = vdwg.mxu0
    %v330 = vsel %vm143, %v217, 0
    %332 = vmatprep.subr.mxu0 0.0
    %333 = vmatpush1.msra.mxu0 0.0
    %334 = vmatprep.subr.mxu0 0.0
    %335 = vmatpush1.msra.mxu0 0.0
    %336 = vmatprep.subr.mxu0 0.0
    %337 = vmatpush1.msra.mxu0 0.0
    %338 = vmatprep.subr.mxu0 0.0
    %339 = vmatpush1.msra.mxu0 0.0
    %340 = vmatprep.subr.mxu0 0.0
    %341 = vmatpush1.msra.mxu0 0.0
    %342 = vmatprep.subr.mxu0 0.0
    %343 = vmatpush1.msra.mxu0 0.0
    %344 = vmatprep.subr.mxu0 0.0
    %345 = vmatpush1.msra.mxu0 0.0
    %346 = vmatprep.subr.mxu0 0.0
    %347 = vmatpush1.msra.mxu0 0.0
    %348 = vmatprep.subr.mxu0 0.0
    %349 = vmatpush1.msra.mxu0 %v247
    %350 = vmatprep.subr.mxu0 0.0
    %351 = vmatpush1.msra.mxu0 %v246
    %352 = vmatprep.subr.mxu0 0.0
    %353 = vmatpush1.msra.mxu0 %v245
    %354 = vmatprep.subr.mxu0 0.0
    %355 = vmatpush1.msra.mxu0 %v244
    %356 = vmatprep.subr.mxu0 0.0
    %357 = vmatpush1.msra.mxu0 %v243
    %358 = vmatprep.subr.mxu0 0.0
    %359 = vmatpush1.msra.mxu0 %v242
    %360 = vmatprep.subr.mxu0 0.0
    %361 = vmatpush1.msra.mxu0 %v241
    %362 = vmatprep.subr.mxu0 0.0
    %363 = vmatpush1.msra.mxu0 %v240
    %364 = vmatprep.subr.mxu0 0.0
    %365 = vmatpush2.msra.mxu0 0.0
    %366 = vmatprep.subr.mxu0 0.0
    %367 = vmatpush2.msra.mxu0 0.0
    %368 = vmatprep.subr.mxu0 0.0
    %369 = vmatpush2.msra.mxu0 0.0
    %370 = vmatprep.subr.mxu0 0.0
    %371 = vmatpush2.msra.mxu0 0.0
    %372 = vmatprep.subr.mxu0 0.0
    %373 = vmatpush2.msra.mxu0 0.0
    %374 = vmatprep.subr.mxu0 0.0
    %375 = vmatpush2.msra.mxu0 0.0
    %376 = vmatprep.subr.mxu0 0.0
    %377 = vmatpush2.msra.mxu0 0.0
    %378 = vmatprep.subr.mxu0 0.0
    %379 = vmatpush2.msra.mxu0 0.0
    %380 = vmatprep.subr.mxu0 0.0
    %381 = vmatpush2.msra.mxu0 0.0
    %382 = vmatprep.subr.mxu0 0.0
    %383 = vmatpush2.msra.mxu0 0.0
    %384 = vmatprep.subr.mxu0 0.0
    %385 = vmatpush2.msra.mxu0 0.0
    %386 = vmatprep.subr.mxu0 0.0
    %387 = vmatpush2.msra.mxu0 0.0
    %388 = vmatprep.subr.mxu0 0.0
    %389 = vmatpush2.msra.mxu0 0.0
    %390 = vmatprep.subr.mxu0 0.0
    %391 = vmatpush2.msra.mxu0 0.0
    %392 = vmatprep.subr.mxu0 0.0
    %393 = vmatpush2.msra.mxu0 0.0
    %394 = vmatprep.subr.mxu0 0.0
    %395 = vmatpush2.msra.mxu0 0.0
    %396 = vmatprep.mubr.f32.mxu0 0.0
    %397 = vmatmul.mubr.f32.gmra.mxu0 %v330
    %v398 = vpop.f32.mrf.mxu0
    %v399 = vadd.f32 %v326, %v398
    %v400 = vpop.f32.mrf.mxu0
    %401 = vdwg.mxu0
    %v402 = vld [vmem:[%s8] sm:$0x1]
    %v404 = vlaneseq
    %v405 = vshrl.u32 %v404, 7
    %v406 = vsub.s32 0, %v405
    %v407 = vrot.slane %v402, %v406
    %v409 = vadd.f32 %v399, %v407
    %v410 = vmax.f32 %v409, 0.0
    %v411 = vld [vmem:[%s9] sm:$0x1]
    %v413 = vlaneseq
    %v414 = vshrl.u32 %v413, 7
    %v415 = vsub.s32 0, %v414
    %v416 = vrot.slane %v411, %v415
    %v418 = vmul.f32 %v410, %v416
    %v419 = vsel %vm143, %v418, 0.0
    %420 = vadd.xlane.f32.xlu0 %v419
    %v421 = vpop.xlane.xlu0 %420
    %v422 = vld [vmem:[#allocation2] sm:$0x1]
    %v424 = vlaneseq
    %v425 = vshrl.u32 %v424, 7
    %v426 = vsub.s32 0, %v425
    %v427 = vrot.slane %v422, %v426
    %v429 = vadd.f32 %v421, %v427
    %v430 = vxor.u32 %v429, 2147483648
    %v431 = vmul.f32 %v430, 1.442695
    %v432 = vpow.pop %v431
    %v433 = vadd.f32 %v432, 1.0
    %v434 = vrcp.pop %v433
    %v435 = vmul.f32 1.0, %v434
    %436 = vxpose.xlu0.b32.start [1/16] %v435, 128
    %437 = vxpose.xlu0.b32.cont [2/16] 0.0, 128
    %438 = vxpose.xlu0.b32.cont [3/16] 0.0, 128
    %439 = vxpose.xlu0.b32.cont [4/16] 0.0, 128
    %440 = vxpose.xlu0.b32.cont [5/16] 0.0, 128
    %441 = vxpose.xlu0.b32.cont [6/16] 0.0, 128
    %442 = vxpose.xlu0.b32.cont [7/16] 0.0, 128
    %443 = vxpose.xlu0.b32.cont [8/16] 0.0, 128
    %444 = vxpose.xlu0.b32.cont [9/16] 0.0, 128
    %445 = vxpose.xlu0.b32.cont [10/16] 0.0, 128
    %446 = vxpose.xlu0.b32.cont [11/16] 0.0, 128
    %447 = vxpose.xlu0.b32.cont [12/16] 0.0, 128
    %448 = vxpose.xlu0.b32.cont [13/16] 0.0, 128
    %449 = vxpose.xlu0.b32.cont [14/16] 0.0, 128
    %450 = vxpose.xlu0.b32.cont [15/16] 0.0, 128
    %451 = vxpose.xlu0.b32.end [16/16] 0.0, 128
    %v452 = vpop.trf.xlu0
    %v453 = vpop.trf.xlu0
    %v454 = vpop.trf.xlu0
    %v455 = vpop.trf.xlu0
    %v456 = vpop.trf.xlu0
    %v457 = vpop.trf.xlu0
    %v458 = vpop.trf.xlu0
    %v459 = vpop.trf.xlu0
    %v460 = vpop.trf.xlu0
    %v461 = vpop.trf.xlu0
    %v462 = vpop.trf.xlu0
    %v463 = vpop.trf.xlu0
    %v464 = vpop.trf.xlu0
    %v465 = vpop.trf.xlu0
    %v466 = vpop.trf.xlu0
    %v467 = vpop.trf.xlu0
    %vm468 = vcmask 57344
    %469 = vst.msk [vmem:[#allocation11] sm:$0x1] %vm468, %v452
    // Predicated region
    $region62: #{tpu_custom_call.1} parent=1 // pred_check
      _
    $region63: #{tpu_custom_call.1} parent=1 // pred_check_branch
      %471 = sbr.rel (0) target = $region65
    $region64: #{tpu_custom_call.1} parent=1 // pred_region
      %s473 = ssub.s32 16, 16
      %474 = vsyncadd [#allocation5], %s473
      %s476 = sshll.u32 [#allocation11], 4
      %s477 = int_to_ptr.vmem [resolvable:$true] %s476
      %479 = dma.vmem_to_hbm [thread:$0]  %s477, 16, %s11, [#allocation5]
    $region65: #{tpu_custom_call.1} parent=1 // pred_fallthru
      _
    // Predicated region
    $region66: #{tpu_custom_call.1} parent=1 // pred_check
      _
    $region67: #{tpu_custom_call.1} parent=1 // pred_check_branch
      %481 = sbr.rel (0) target = $region69
    $region68: #{tpu_custom_call.1} parent=1 // pred_region
      %482 = dma.done [#allocation5], 16
    $region69: #{tpu_custom_call.1} parent=1 // pred_fallthru
      _
    %483 = vsyncpa [#allocation4], 1
    %484 = vsyncpa [#allocation7], 1
    %485 = vsyncpa [#allocation10], 1
    %486 = vsyncpa [#allocation5], 1

</llo_original>
